<compile_context>
chip_gen: v7x
topology: tpu7x:2x2x1
jax: 0.10.0
libtpu: 0.0.40
codegen_flags: <defaults>
</compile_context>

<pallas_src>
import functools

import jax
import jax.numpy as jnp
from jax.experimental import pallas as pl
from jax.experimental.pallas import tpu as pltpu


def _round_up(n, m):
    return ((n + m - 1) // m) * m


def _largest_divisor_leq(n, target):
    target = max(1, min(n, target))
    for d in range(target, 0, -1):
        if n % d == 0:
            return d
    return 1


def rnn_kernel(x_ref, w_ihT_ref, w_hhT_ref, w_fcT_ref, b_fc_ref,
               out_ref, h_ref, pre_ref):
    """One grid step = one chunk of T_c time steps for the whole (padded) batch."""
    c = pl.program_id(0)
    n_chunks = pl.num_programs(0)

    rows, _ = x_ref.shape                  # rows = T_c * Bp
    Bp, Hp = h_ref.shape
    T_c = rows // Bp
    cdt = w_hhT_ref.dtype                  # matmul operand dtype (f32 or bf16)

    # h_0 = 0 (only on the first chunk; the scratch carries h across chunks).
    @pl.when(c == 0)
    def _init():
        h_ref[...] = jnp.zeros_like(h_ref)

    # ---- Phase 1 (non-recurrent, chunked): pre-activations for T_c steps in
    # one MXU matmul.  The fused RNN bias (b_ih + b_hh) rides in an extra
    # "ones" column of x / extra row of w_ihT, so no broadcast-add is needed.
    pre_ref[...] = jnp.dot(x_ref[...], w_ihT_ref[...],
                           preferred_element_type=jnp.float32)

    # ---- Phase 2: serial recurrence over the chunk.
    w_hhT = w_hhT_ref[...]

    def step(t, h):
        off = pl.multiple_of(t * Bp, Bp)
        pre_t = pre_ref[pl.ds(off, Bp), :]                       # (Bp, Hp) f32
        hw = jnp.dot(h.astype(cdt), w_hhT,
                     preferred_element_type=jnp.float32)         # MXU, f32 acc
        return jnp.tanh(pre_t + hw)                              # VPU/EUP in f32

    h = jax.lax.fori_loop(0, T_c, step, h_ref[...], unroll=min(T_c, 8))
    h_ref[...] = h

    # ---- Phase 3: final fully-connected layer on h_T (last chunk only).
    @pl.when(c == n_chunks - 1)
    def _fc():
        out_ref[...] = (
            jnp.dot(h.astype(cdt), w_fcT_ref[...],
                    preferred_element_type=jnp.float32)
            + b_fc_ref[...]
        ).astype(out_ref.dtype)


def rnn_forward(x, w_ih, w_hh, b_ih, b_hh, w_fc, b_fc, *,
                compute_dtype=jnp.float32, chunk_t=16):
    """x: (B, T, I) float32 (batch_first, like PyTorch).  Returns (B, O) float32."""
    B, T, I = x.shape
    H = w_ih.shape[0]
    O = w_fc.shape[0]

    # TPU-friendly geometry: batch -> sublane multiple of 8; hidden / output ->
    # lane multiples of 128.  The input feature dim stays near its natural size
    # (rounded to 8) -- no 8x HBM inflation -- plus one column for the bias fold.
    Bp = _round_up(B, 8)
    Hp = _round_up(H, 128)
    Op = _round_up(O, 128)
    If = _round_up(I + 1, 8)               # +1 "ones" column carries b_ih + b_hh

    # Time chunking: largest divisor of T that is <= chunk_t.
    T_c = _largest_divisor_leq(T, chunk_t)
    n_chunks = T // T_c

    cdt = jnp.dtype(compute_dtype)

    # --- Glue in plain JAX: time-major, batch pad, bias-ones column, flatten.
    x_tm = jnp.transpose(x, (1, 0, 2)).astype(jnp.float32)        # (T, B, I)
    x_pad = (jnp.zeros((T, Bp, If), jnp.float32)
             .at[:, :B, :I].set(x_tm)
             .at[:, :, I].set(1.0))                               # bias column
    x2d = x_pad.reshape(T * Bp, If).astype(cdt)                   # (T*Bp, If)

    w_ihT = (jnp.zeros((If, Hp), jnp.float32)
             .at[:I, :H].set(w_ih.T)
             .at[I, :H].set(b_ih + b_hh)).astype(cdt)             # bias row
    w_hhT = jnp.zeros((Hp, Hp), jnp.float32).at[:H, :H].set(w_hh.T).astype(cdt)
    w_fcT = jnp.zeros((Hp, Op), jnp.float32).at[:H, :O].set(w_fc.T).astype(cdt)
    b_fcp = jnp.zeros((1, Op), jnp.float32).at[0, :O].set(b_fc)   # add stays f32

    # --- Explicit VMEM budget (review: set vmem_limit_bytes; matters on v7x).
    isz = cdt.itemsize
    resident = (If * Hp + Hp * Hp + Hp * Op) * isz + Op * 4       # weights + fc bias
    x_chunks = 2 * (T_c * Bp * If) * isz                          # double-buffered x
    out_buf = 2 * (Bp * Op) * 4
    scratch = (T_c * Bp * Hp + Bp * Hp) * 4                       # pre + h carry
    vmem_limit = min(2 * (resident + x_chunks + out_buf + scratch) + (4 << 20),
                     64 << 20)

    out_pad = pl.pallas_call(
        rnn_kernel,
        out_shape=jax.ShapeDtypeStruct((Bp, Op), jnp.float32),
        grid=(n_chunks,),
        in_specs=[
            # x: streamed from HBM one time-chunk at a time (pipelined DMA).
            pl.BlockSpec((T_c * Bp, If), lambda c: (c, 0)),
            # Weights / fc bias: constant block index -> fetched once, resident.
            pl.BlockSpec((If, Hp), lambda c: (0, 0)),
            pl.BlockSpec((Hp, Hp), lambda c: (0, 0)),
            pl.BlockSpec((Hp, Op), lambda c: (0, 0)),
            pl.BlockSpec((1, Op), lambda c: (0, 0)),
        ],
        out_specs=pl.BlockSpec((Bp, Op), lambda c: (0, 0)),
        scratch_shapes=[
            pltpu.VMEM((Bp, Hp), jnp.float32),            # h carried across chunks
            pltpu.VMEM((T_c * Bp, Hp), jnp.float32),      # per-chunk pre-activations
        ],
        compiler_params=pltpu.CompilerParams(
            dimension_semantics=("arbitrary",),           # serial recurrence axis
            vmem_limit_bytes=int(vmem_limit)),
    )(x2d, w_ihT, w_hhT, w_fcT, b_fcp)

    return out_pad[:B, :O]


rnn_forward_jit = jax.jit(rnn_forward, static_argnames=("compute_dtype", "chunk_t"))


def rnn_reference(x, w_ih, w_hh, b_ih, b_hh, w_fc, b_fc):
    """Pure-JAX reference matching nn.RNN(batch_first=True) + nn.Linear."""
    B, T, I = x.shape
    H = w_ih.shape[0]
    h = jnp.zeros((B, H), jnp.float32)

    def step(h, x_t):
        h = jnp.tanh(x_t @ w_ih.T + b_ih + h @ w_hh.T + b_hh)
        return h, None

    h_T, _ = jax.lax.scan(step, h, jnp.transpose(x, (1, 0, 2)))
    return h_T @ w_fc.T + b_fc


if __name__ == "__main__":
    # Small shapes consistent with the module's forward.
    B, T, I, H, O = 4, 8, 16, 32, 8

    key = jax.random.PRNGKey(0)
    ks = jax.random.split(key, 7)
    scale = 1.0 / jnp.sqrt(H)
    x = jax.random.normal(ks[0], (B, T, I), jnp.float32)
    w_ih = jax.random.uniform(ks[1], (H, I), jnp.float32, -scale, scale)
    w_hh = jax.random.uniform(ks[2], (H, H), jnp.float32, -scale, scale)
    b_ih = jax.random.uniform(ks[3], (H,), jnp.float32, -scale, scale)
    b_hh = jax.random.uniform(ks[4], (H,), jnp.float32, -scale, scale)
    w_fc = jax.random.uniform(ks[5], (O, H), jnp.float32, -scale, scale)
    b_fc = jax.random.uniform(ks[6], (O,), jnp.float32, -scale, scale)

    ref = rnn_reference(x, w_ih, w_hh, b_ih, b_hh, w_fc, b_fc)

    # f32 matmul path, multi-chunk grid (chunk_t=4 -> 2 pipelined time-chunks,
    # exercising the cross-chunk hidden-state carry).
    out = rnn_forward_jit(x, w_ih, w_hh, b_ih, b_hh, w_fc, b_fc,
                          compute_dtype=jnp.float32, chunk_t=4)
    out = jax.block_until_ready(out)
    assert out.shape == (B, O)
    assert jnp.allclose(out, ref, atol=1e-5, rtol=1e-5)

    # bf16 matmul operands (f32 accumulation / elementwise), single chunk.
    out_bf16 = rnn_forward_jit(x, w_ih, w_hh, b_ih, b_hh, w_fc, b_fc,
                               compute_dtype=jnp.bfloat16, chunk_t=8)
    out_bf16 = jax.block_until_ready(out_bf16)
    assert jnp.allclose(out_bf16, ref, atol=5e-2, rtol=5e-2)

    print("KERNEL_OK")
</pallas_src>

<mosaic_0001>
module attributes {stable_mosaic.version = 11 : i64} {
  func.func @rnn_kernel(%arg0: i32, %arg1: memref<32x24xf32, #tpu.memory_space<vmem>>, %arg2: memref<24x128xf32, #tpu.memory_space<vmem>>, %arg3: memref<128x128xf32, #tpu.memory_space<vmem>>, %arg4: memref<128x128xf32, #tpu.memory_space<vmem>>, %arg5: memref<1x128xf32, #tpu.memory_space<vmem>>, %arg6: memref<8x128xf32, #tpu.memory_space<vmem>>, %arg7: memref<8x128xf32, #tpu.memory_space<vmem>>, %arg8: memref<32x128xf32, #tpu.memory_space<vmem>>) attributes {dimension_semantics = [#tpu.dimension_semantics<arbitrary>], iteration_bounds = array<i64: 2>, scalar_prefetch = 0 : i64, scratch_operands = 2 : i64, tpu.core_type = #tpu.core_type<tc>, window_params = [{transform_indices = @transform_0, window_bounds = array<i64: 32, 24>}, {pipeline_mode = #tpu.pipeline_mode<synchronous>, transform_indices = @transform_1, window_bounds = array<i64: 24, 128>}, {pipeline_mode = #tpu.pipeline_mode<synchronous>, transform_indices = @transform_2, window_bounds = array<i64: 128, 128>}, {pipeline_mode = #tpu.pipeline_mode<synchronous>, transform_indices = @transform_3, window_bounds = array<i64: 128, 128>}, {pipeline_mode = #tpu.pipeline_mode<synchronous>, transform_indices = @transform_4, window_bounds = array<i64: 1, 128>}, {pipeline_mode = #tpu.pipeline_mode<synchronous>, transform_indices = @transform_5, window_bounds = array<i64: 8, 128>}]} {
    %c0_i32 = arith.constant 0 : i32
    %0 = arith.cmpi eq, %arg0, %c0_i32 : i32
    %1 = arith.extui %0 : i1 to i32
    %c0_i32_0 = arith.constant 0 : i32
    %2 = arith.cmpi ne, %1, %c0_i32_0 : i32
    scf.if %2 {
      %cst_26 = arith.constant 0.000000e+00 : f32
      %41 = vector.broadcast %cst_26 : f32 to vector<8x128xf32>
      %c0_27 = arith.constant 0 : index
      %c0_28 = arith.constant 0 : index
      %42 = vector.load %arg7[%c0_27, %c0_28] : memref<8x128xf32, #tpu.memory_space<vmem>>, vector<8x128xf32>
      tpu.vector_store %arg7[%c0_27, %c0_28], %41 {strides = array<i32>} : memref<8x128xf32, #tpu.memory_space<vmem>>, vector<8x128xf32>,
    } else {
    }
    %c0 = arith.constant 0 : index
    %c0_1 = arith.constant 0 : index
    %3 = vector.load %arg1[%c0, %c0_1] : memref<32x24xf32, #tpu.memory_space<vmem>>, vector<32x24xf32>
    %c0_2 = arith.constant 0 : index
    %c0_3 = arith.constant 0 : index
    %4 = vector.load %arg2[%c0_2, %c0_3] : memref<24x128xf32, #tpu.memory_space<vmem>>, vector<24x128xf32>
    %cst = arith.constant dense<0.000000e+00> : vector<32x128xf32>
    %5 = tpu.matmul %3, %4, %cst {dimension_numbers = #tpu.dot_dimension_numbers<[1], [0], [0], [1], [0, 0, 1, 1], [], []>} : vector<32x24xf32>, vector<24x128xf32>, vector<32x128xf32> -> vector<32x128xf32>
    %c0_4 = arith.constant 0 : index
    %c0_5 = arith.constant 0 : index
    %6 = vector.load %arg8[%c0_4, %c0_5] : memref<32x128xf32, #tpu.memory_space<vmem>>, vector<32x128xf32>
    tpu.vector_store %arg8[%c0_4, %c0_5], %5 {strides = array<i32>} : memref<32x128xf32, #tpu.memory_space<vmem>>, vector<32x128xf32>,
    %c0_6 = arith.constant 0 : index
    %c0_7 = arith.constant 0 : index
    %7 = vector.load %arg3[%c0_6, %c0_7] : memref<128x128xf32, #tpu.memory_space<vmem>>, vector<128x128xf32>
    %c0_8 = arith.constant 0 : index
    %c0_9 = arith.constant 0 : index
    %8 = vector.load %arg7[%c0_8, %c0_9] : memref<8x128xf32, #tpu.memory_space<vmem>>, vector<8x128xf32>
    %c0_i32_10 = arith.constant 0 : i32
    %c8_i32 = arith.constant 8 : i32
    %9 = arith.muli %c0_i32_10, %c8_i32 : i32
    %10 = tpu.assume_multiple %9, 8 : i32
    %11 = arith.index_cast %10 : i32 to index
    %c0_11 = arith.constant 0 : index
    %12 = vector.load %arg8[%11, %c0_11] : memref<32x128xf32, #tpu.memory_space<vmem>>, vector<8x128xf32>
    %cst_12 = arith.constant dense<0.000000e+00> : vector<8x128xf32>
    %13 = tpu.matmul %8, %7, %cst_12 {dimension_numbers = #tpu.dot_dimension_numbers<[1], [0], [0], [1], [0, 0, 1, 1], [], []>} : vector<8x128xf32>, vector<128x128xf32>, vector<8x128xf32> -> vector<8x128xf32>
    %14 = arith.addf %12, %13 : vector<8x128xf32>
    %15 = math.tanh %14 : vector<8x128xf32>
    %c1_i32 = arith.constant 1 : i32
    %c8_i32_13 = arith.constant 8 : i32
    %16 = arith.muli %c1_i32, %c8_i32_13 : i32
    %17 = tpu.assume_multiple %16, 8 : i32
    %18 = arith.index_cast %17 : i32 to index
    %c0_14 = arith.constant 0 : index
    %19 = vector.load %arg8[%18, %c0_14] : memref<32x128xf32, #tpu.memory_space<vmem>>, vector<8x128xf32>
    %cst_15 = arith.constant dense<0.000000e+00> : vector<8x128xf32>
    %20 = tpu.matmul %15, %7, %cst_15 {dimension_numbers = #tpu.dot_dimension_numbers<[1], [0], [0], [1], [0, 0, 1, 1], [], []>} : vector<8x128xf32>, vector<128x128xf32>, vector<8x128xf32> -> vector<8x128xf32>
    %21 = arith.addf %19, %20 : vector<8x128xf32>
    %22 = math.tanh %21 : vector<8x128xf32>
    %c2_i32 = arith.constant 2 : i32
    %c8_i32_16 = arith.constant 8 : i32
    %23 = arith.muli %c2_i32, %c8_i32_16 : i32
    %24 = tpu.assume_multiple %23, 8 : i32
    %25 = arith.index_cast %24 : i32 to index
    %c0_17 = arith.constant 0 : index
    %26 = vector.load %arg8[%25, %c0_17] : memref<32x128xf32, #tpu.memory_space<vmem>>, vector<8x128xf32>
    %cst_18 = arith.constant dense<0.000000e+00> : vector<8x128xf32>
    %27 = tpu.matmul %22, %7, %cst_18 {dimension_numbers = #tpu.dot_dimension_numbers<[1], [0], [0], [1], [0, 0, 1, 1], [], []>} : vector<8x128xf32>, vector<128x128xf32>, vector<8x128xf32> -> vector<8x128xf32>
    %28 = arith.addf %26, %27 : vector<8x128xf32>
    %29 = math.tanh %28 : vector<8x128xf32>
    %c3_i32 = arith.constant 3 : i32
    %c8_i32_19 = arith.constant 8 : i32
    %30 = arith.muli %c3_i32, %c8_i32_19 : i32
    %31 = tpu.assume_multiple %30, 8 : i32
    %32 = arith.index_cast %31 : i32 to index
    %c0_20 = arith.constant 0 : index
    %33 = vector.load %arg8[%32, %c0_20] : memref<32x128xf32, #tpu.memory_space<vmem>>, vector<8x128xf32>
    %cst_21 = arith.constant dense<0.000000e+00> : vector<8x128xf32>
    %34 = tpu.matmul %29, %7, %cst_21 {dimension_numbers = #tpu.dot_dimension_numbers<[1], [0], [0], [1], [0, 0, 1, 1], [], []>} : vector<8x128xf32>, vector<128x128xf32>, vector<8x128xf32> -> vector<8x128xf32>
    %35 = arith.addf %33, %34 : vector<8x128xf32>
    %36 = math.tanh %35 : vector<8x128xf32>
    %c4_i32 = arith.constant 4 : i32
    %c0_22 = arith.constant 0 : index
    %c0_23 = arith.constant 0 : index
    %37 = vector.load %arg7[%c0_22, %c0_23] : memref<8x128xf32, #tpu.memory_space<vmem>>, vector<8x128xf32>
    tpu.vector_store %arg7[%c0_22, %c0_23], %36 {strides = array<i32>} : memref<8x128xf32, #tpu.memory_space<vmem>>, vector<8x128xf32>,
    %c1_i32_24 = arith.constant 1 : i32
    %38 = arith.cmpi eq, %arg0, %c1_i32_24 : i32
    %39 = arith.extui %38 : i1 to i32
    %c0_i32_25 = arith.constant 0 : i32
    %40 = arith.cmpi ne, %39, %c0_i32_25 : i32
    scf.if %40 {
      %c0_26 = arith.constant 0 : index
      %c0_27 = arith.constant 0 : index
      %41 = vector.load %arg4[%c0_26, %c0_27] : memref<128x128xf32, #tpu.memory_space<vmem>>, vector<128x128xf32>
      %cst_28 = arith.constant dense<0.000000e+00> : vector<8x128xf32>
      %42 = tpu.matmul %36, %41, %cst_28 {dimension_numbers = #tpu.dot_dimension_numbers<[1], [0], [0], [1], [0, 0, 1, 1], [], []>} : vector<8x128xf32>, vector<128x128xf32>, vector<8x128xf32> -> vector<8x128xf32>
      %c0_29 = arith.constant 0 : index
      %c0_30 = arith.constant 0 : index
      %43 = vector.load %arg5[%c0_29, %c0_30] : memref<1x128xf32, #tpu.memory_space<vmem>>, vector<1x128xf32>
      %44 = vector.broadcast %43 : vector<1x128xf32> to vector<8x128xf32>
      %45 = arith.addf %42, %44 : vector<8x128xf32>
      %c0_31 = arith.constant 0 : index
      %c0_32 = arith.constant 0 : index
      %46 = vector.load %arg6[%c0_31, %c0_32] : memref<8x128xf32, #tpu.memory_space<vmem>>, vector<8x128xf32>
      tpu.vector_store %arg6[%c0_31, %c0_32], %45 {strides = array<i32>} : memref<8x128xf32, #tpu.memory_space<vmem>>, vector<8x128xf32>,
    } else {
    }
    return
  }
  func.func @transform_0(%arg0: i32) -> (i32, i32) {
    %c0_i32 = arith.constant 0 : i32
    %c0_i32_0 = arith.constant 0 : i32
    return %arg0, %c0_i32 : i32, i32
  }
  func.func @transform_1(%arg0: i32) -> (i32, i32) {
    %c0_i32 = arith.constant 0 : i32
    %c0_i32_0 = arith.constant 0 : i32
    %c0_i32_1 = arith.constant 0 : i32
    return %c0_i32, %c0_i32_0 : i32, i32
  }
  func.func @transform_2(%arg0: i32) -> (i32, i32) {
    %c0_i32 = arith.constant 0 : i32
    %c0_i32_0 = arith.constant 0 : i32
    %c0_i32_1 = arith.constant 0 : i32
    return %c0_i32, %c0_i32_0 : i32, i32
  }
  func.func @transform_3(%arg0: i32) -> (i32, i32) {
    %c0_i32 = arith.constant 0 : i32
    %c0_i32_0 = arith.constant 0 : i32
    %c0_i32_1 = arith.constant 0 : i32
    return %c0_i32, %c0_i32_0 : i32, i32
  }
  func.func @transform_4(%arg0: i32) -> (i32, i32) {
    %c0_i32 = arith.constant 0 : i32
    %c0_i32_0 = arith.constant 0 : i32
    %c0_i32_1 = arith.constant 0 : i32
    return %c0_i32, %c0_i32_0 : i32, i32
  }
  func.func @transform_5(%arg0: i32) -> (i32, i32) {
    %c0_i32 = arith.constant 0 : i32
    %c0_i32_0 = arith.constant 0 : i32
    %c0_i32_1 = arith.constant 0 : i32
    return %c0_i32, %c0_i32_0 : i32, i32
  }
}

</mosaic_0001>

<llo_original>
// kernel: rnn_forward.1
$region0: #{rnn_forward.1}
  #allocation0 [shape = 'u32[]', space=smem, size = 0x4, offset = 0x4, fixed_abs, tag = 'smem constant byte address 0x4 - core index']
  #allocation1 [shape = 'u32[144,128]{1,0:T(1,128)}', space=vmem, size = 0x12000, scoped, tag = 'internal scratch']
  #allocation2 [shape = 'f32[8,128]{1,0:T(8,128)}', space=vmem, size = 0x1000, scoped, tag = 'scratch operand']
  #allocation3 [shape = 'f32[32,128]{1,0:T(8,128)}', space=vmem, size = 0x4000, scoped, tag = 'scratch operand']
  %s0 = inlined_call_operand.vmem [shape: f32[64,24], index: 0, kind: input, shape index: {}]
  %s1 = inlined_call_operand.vmem [shape: f32[24,128], index: 1, kind: input, shape index: {}]
  %s2 = inlined_call_operand.vmem [shape: f32[128,128], index: 2, kind: input, shape index: {}]
  %s3 = inlined_call_operand.vmem [shape: f32[128,128], index: 3, kind: input, shape index: {}]
  %s4 = inlined_call_operand.vmem [shape: f32[1,128], index: 4, kind: input, shape index: {}]
  %s5 = inlined_call_operand.vmem [shape: f32[8,128], index: 5, kind: output, shape index: {}]
  %s6 = sld [smem:[#allocation0]]
  $region61: #{rnn_forward.1} parent=0
    _
  %s8 = ssub.s32 1, %s6
  %s9 = scalar_select 0, %s8, %s6
  loop: start=0, step=1, limit=4
  $region2: #{rnn_forward.1} parent=0 // loop_pre_header
    _
  $region3: #{rnn_forward.1} parent=0 // loop_header
    %s11 = sphi 0, %s15
    %p12 = scmp.ge.s32.totalorder %s11, 4
    %s21 = sphi 0, %s23
    %s24 = sphi 0, %s21
    %s25 = sphi 0, %s24
    %s41 = sphi 0, %s25
    %s45 = sphi 0, %s45
    %s47 = sphi 0, %s45
    %s48 = sphi 0, %s47
    %s62 = sphi 0, %s48
    %s66 = sphi 0, %s66
    %s68 = sphi 0, %s66
    %s69 = sphi 0, %s68
    %s83 = sphi 0, %s69
    %s87 = sphi 0, %s87
    %s89 = sphi 0, %s87
    %s90 = sphi 0, %s89
    %s104 = sphi 0, %s90
    %s108 = sphi 0, %s108
    %s110 = sphi 0, %s108
    %s111 = sphi 0, %s110
    %s125 = sphi 0, %s111
    %s129 = sphi 0, %s129
    %s131 = sphi 0, %s129
    %s132 = sphi 0, %s131
    %s146 = sphi 0, %s132
  $region4: #{rnn_forward.1} parent=0 // loop_header_branch
    %14 = sbr.rel (%p12) target = $region8
  $region5: #{rnn_forward.1} parent=0 // loop_body
    %s16 = ssub.s32 %s11, 1
    %s17 = ssub.s32 %s11, 2
    %s18 = sadd.s32 %s11, 1
    %s19 = ssub.s32 %s11, %s18
    %p20 = scmp.eq.s32.totalorder %s19, 0
    %s22 = sadd.s32 %s21, 1
    %s23 = scalar_select %p20, %s21, %s22
    %p26 = pneg %p20
    %p27 = scmp.eq.s32.totalorder %s11, 1
    %p28 = por %p26, %p27
    %p29 = scmp.ne.s32.totalorder %s21, %s24
    %p30 = scmp.eq.s32.totalorder %s11, 0
    %p31 = por %p29, %p30
    %p32 = scmp.ne.s32.totalorder %s21, %s24
    %p33 = scmp.eq.s32.totalorder %s16, 1
    %p34 = por %p32, %p33
    %p35 = scmp.ne.s32.totalorder %s24, %s25
    %p36 = scmp.eq.s32.totalorder %s16, 0
    %p37 = por %p35, %p36
    %p38 = scmp.ne.s32.totalorder %s24, %s25
    %p39 = scmp.eq.s32.totalorder %s17, 1
    %p40 = por %p38, %p39
    %p42 = scmp.ne.s32.totalorder %s25, %s41
    %p43 = scmp.eq.s32.totalorder %s17, 0
    %p44 = por %p42, %p43
    %s46 = sadd.s32 %s45, 1
    %p49 = scmp.eq.s32.totalorder %s11, 1
    %p50 = scmp.ne.s32.totalorder %s45, %s47
    %p51 = scmp.eq.s32.totalorder %s11, 0
    %p52 = por %p50, %p51
    %p53 = scmp.ne.s32.totalorder %s45, %s47
    %p54 = scmp.eq.s32.totalorder %s16, 1
    %p55 = por %p53, %p54
    %p56 = scmp.ne.s32.totalorder %s47, %s48
    %p57 = scmp.eq.s32.totalorder %s16, 0
    %p58 = por %p56, %p57
    %p59 = scmp.ne.s32.totalorder %s47, %s48
    %p60 = scmp.eq.s32.totalorder %s17, 1
    %p61 = por %p59, %p60
    %p63 = scmp.ne.s32.totalorder %s48, %s62
    %p64 = scmp.eq.s32.totalorder %s17, 0
    %p65 = por %p63, %p64
    %s67 = sadd.s32 %s66, 1
    %p70 = scmp.eq.s32.totalorder %s11, 1
    %p71 = scmp.ne.s32.totalorder %s66, %s68
    %p72 = scmp.eq.s32.totalorder %s11, 0
    %p73 = por %p71, %p72
    %p74 = scmp.ne.s32.totalorder %s66, %s68
    %p75 = scmp.eq.s32.totalorder %s16, 1
    %p76 = por %p74, %p75
    %p77 = scmp.ne.s32.totalorder %s68, %s69
    %p78 = scmp.eq.s32.totalorder %s16, 0
    %p79 = por %p77, %p78
    %p80 = scmp.ne.s32.totalorder %s68, %s69
    %p81 = scmp.eq.s32.totalorder %s17, 1
    %p82 = por %p80, %p81
    %p84 = scmp.ne.s32.totalorder %s69, %s83
    %p85 = scmp.eq.s32.totalorder %s17, 0
    %p86 = por %p84, %p85
    %s88 = sadd.s32 %s87, 1
    %p91 = scmp.eq.s32.totalorder %s11, 1
    %p92 = scmp.ne.s32.totalorder %s87, %s89
    %p93 = scmp.eq.s32.totalorder %s11, 0
    %p94 = por %p92, %p93
    %p95 = scmp.ne.s32.totalorder %s87, %s89
    %p96 = scmp.eq.s32.totalorder %s16, 1
    %p97 = por %p95, %p96
    %p98 = scmp.ne.s32.totalorder %s89, %s90
    %p99 = scmp.eq.s32.totalorder %s16, 0
    %p100 = por %p98, %p99
    %p101 = scmp.ne.s32.totalorder %s89, %s90
    %p102 = scmp.eq.s32.totalorder %s17, 1
    %p103 = por %p101, %p102
    %p105 = scmp.ne.s32.totalorder %s90, %s104
    %p106 = scmp.eq.s32.totalorder %s17, 0
    %p107 = por %p105, %p106
    %s109 = sadd.s32 %s108, 1
    %p112 = scmp.eq.s32.totalorder %s11, 1
    %p113 = scmp.ne.s32.totalorder %s108, %s110
    %p114 = scmp.eq.s32.totalorder %s11, 0
    %p115 = por %p113, %p114
    %p116 = scmp.ne.s32.totalorder %s108, %s110
    %p117 = scmp.eq.s32.totalorder %s16, 1
    %p118 = por %p116, %p117
    %p119 = scmp.ne.s32.totalorder %s110, %s111
    %p120 = scmp.eq.s32.totalorder %s16, 0
    %p121 = por %p119, %p120
    %p122 = scmp.ne.s32.totalorder %s110, %s111
    %p123 = scmp.eq.s32.totalorder %s17, 1
    %p124 = por %p122, %p123
    %p126 = scmp.ne.s32.totalorder %s111, %s125
    %p127 = scmp.eq.s32.totalorder %s17, 0
    %p128 = por %p126, %p127
    %s130 = sadd.s32 %s129, 1
    %p133 = scmp.eq.s32.totalorder %s11, 1
    %p134 = scmp.ne.s32.totalorder %s129, %s131
    %p135 = scmp.eq.s32.totalorder %s11, 0
    %p136 = por %p134, %p135
    %p137 = scmp.ne.s32.totalorder %s129, %s131
    %p138 = scmp.eq.s32.totalorder %s16, 1
    %p139 = por %p137, %p138
    %p140 = scmp.ne.s32.totalorder %s131, %s132
    %p141 = scmp.eq.s32.totalorder %s16, 0
    %p142 = por %p140, %p141
    %p143 = scmp.ne.s32.totalorder %s131, %s132
    %p144 = scmp.eq.s32.totalorder %s17, 1
    %p145 = por %p143, %p144
    %p147 = scmp.ne.s32.totalorder %s132, %s146
    %p148 = scmp.eq.s32.totalorder %s17, 0
    %p149 = por %p147, %p148
    %p150 = scmp.le.s32.totalorder 1, %s11
    %p151 = scmp.lt.s32.totalorder %s11, 3
    %p152 = pnand %p150, %p151
    %p153 = pneg %p152
    // Predicated region
    $region9: #{rnn_forward.1} parent=5 // pred_check
      _
    $region10: #{rnn_forward.1} parent=5 // pred_check_branch
      %155 = sbr.rel (%p152) target = $region12
    $region11: #{rnn_forward.1} parent=5 // pred_region
      %s156 = ssub.s32 %s11, 1
      // Predicated region
      $region13: #{rnn_forward.1} parent=11 // pred_check
        %p157 = pneg %p58
      $region14: #{rnn_forward.1} parent=11 // pred_check_branch
        %159 = sbr.rel (%p157) target = $region16
      $region15: #{rnn_forward.1} parent=11 // pred_region
        _
      $region16: #{rnn_forward.1} parent=11 // pred_fallthru
        _
      // Predicated region
      $region17: #{rnn_forward.1} parent=11 // pred_check
        %p160 = pneg %p79
      $region18: #{rnn_forward.1} parent=11 // pred_check_branch
        %162 = sbr.rel (%p160) target = $region20
      $region19: #{rnn_forward.1} parent=11 // pred_region
        _
      $region20: #{rnn_forward.1} parent=11 // pred_fallthru
        _
      // Predicated region
      $region21: #{rnn_forward.1} parent=11 // pred_check
        %p163 = pneg %p100
      $region22: #{rnn_forward.1} parent=11 // pred_check_branch
        %165 = sbr.rel (%p163) target = $region24
      $region23: #{rnn_forward.1} parent=11 // pred_region
        _
      $region24: #{rnn_forward.1} parent=11 // pred_fallthru
        _
      // Predicated region
      $region25: #{rnn_forward.1} parent=11 // pred_check
        %p166 = pneg %p121
      $region26: #{rnn_forward.1} parent=11 // pred_check_branch
        %168 = sbr.rel (%p166) target = $region28
      $region27: #{rnn_forward.1} parent=11 // pred_region
        _
      $region28: #{rnn_forward.1} parent=11 // pred_fallthru
        _
    $region12: #{rnn_forward.1} parent=5 // pred_fallthru
      _
    %p169 = scmp.lt.s32.totalorder %s11, 2
    // Predicated region
    $region29: #{rnn_forward.1} parent=5 // pred_check
      %p170 = pneg %p169
    $region30: #{rnn_forward.1} parent=5 // pred_check_branch
      %172 = sbr.rel (%p170) target = $region32
    $region31: #{rnn_forward.1} parent=5 // pred_region
      // Predicated region
      $region33: #{rnn_forward.1} parent=31 // pred_check
        %p173 = pneg %p31
      $region34: #{rnn_forward.1} parent=31 // pred_check_branch
        %175 = sbr.rel (%p173) target = $region36
      $region35: #{rnn_forward.1} parent=31 // pred_region
        %s176 = smul.u32 4, %s11
        %p177 = scmp.lt.s32.totalorder %s176, 7
        %s178 = scalar_select %p177, %s176, 7
        %s179 = smul.addr %s178, 8
        %s180 = scalar_lea.vmem %s0, %s179
        %s181 = smul.u32 4, %s11
      $region36: #{rnn_forward.1} parent=31 // pred_fallthru
        _
    $region32: #{rnn_forward.1} parent=5 // pred_fallthru
      _
    %p182 = scmp.le.s32.totalorder 1, %s11
    %p183 = scmp.lt.s32.totalorder %s11, 3
    %p184 = pnand %p182, %p183
    %p185 = pneg %p184
    // Predicated region
    $region37: #{rnn_forward.1} parent=5 // pred_check
      _
    $region38: #{rnn_forward.1} parent=5 // pred_check_branch
      %187 = sbr.rel (%p184) target = $region40
    $region39: #{rnn_forward.1} parent=5 // pred_region
      %s188 = ssub.s32 %s11, 1
      %s189 = smul.u32 4, %s16
      %p190 = scmp.lt.s32.totalorder %s189, 7
      %s191 = scalar_select %p190, %s189, 7
      %s192 = smul.addr %s191, 8
      %s193 = scalar_lea.vmem %s0, %s192
      %p194 = pneg %p37
      %p195 = pneg %p34
      %p196 = pneg %p58
      %p197 = pneg %p55
      %p198 = pneg %p79
      %p199 = pneg %p76
      %p200 = pneg %p100
      %p201 = pneg %p97
      %p202 = pneg %p121
      %p203 = pneg %p118
      %p204 = pneg %p142
      %p205 = pneg %p139
      %s206 = smul.u32 4, %s16
      %p207 = scmp.lt.s32.totalorder %s206, 7
      %s208 = scalar_select %p207, %s206, 7
      %s209 = smul.addr %s208, 8
      %s210 = scalar_lea.vmem %s0, %s209
      %s211 = smul.u32 4, %s16
      %p212 = scmp.eq.s32.totalorder %s16, 0
      // Predicated region
      $region41: #{rnn_forward.1} parent=39 // pred_check
        %p213 = pneg %p212
      $region42: #{rnn_forward.1} parent=39 // pred_check_branch
        %215 = sbr.rel (%p213) target = $region44
      $region43: #{rnn_forward.1} parent=39 // pred_region
        %216 = vst [vmem:[#allocation2] sm:$0xff] 0.0
      $region44: #{rnn_forward.1} parent=39 // pred_fallthru
        _
      %v217 = vld [vmem:[%s210] sm:$0xff]
      %v218 = vld [vmem:[%s210 + $0x8] sm:$0xff]
      %v219 = vld [vmem:[%s210 + $0x10] sm:$0xff]
      %v220 = vld [vmem:[%s210 + $0x18] sm:$0xff]
      %v221 = vld [vmem:[%s1] sm:$0xff]
      %v222 = vld [vmem:[%s1 + $0x8] sm:$0xff]
      %v223 = vld [vmem:[%s1 + $0x10] sm:$0xff]
      %vm224 = vcmask 195584
      %v226 = vsel %vm224, %v217, 0
      %v229 = vsel %vm224, %v218, 0
      %v232 = vsel %vm224, %v219, 0
      %v235 = vsel %vm224, %v220, 0
      %237 = vmatprep.subr.mxu0 0.0
      %238 = vmatpush1.msra.mxu0 %v221
      %239 = vmatprep.subr.mxu0 0.0
      %240 = vmatpush1.msra.mxu0 %v222
      %241 = vmatprep.subr.mxu0 0.0
      %242 = vmatpush1.msra.mxu0 %v223
      %243 = vmatprep.subr.mxu0 0.0
      %244 = vmatpush1.msra.mxu0 0.0
      %245 = vmatprep.subr.mxu0 0.0
      %246 = vmatpush1.msra.mxu0 0.0
      %247 = vmatprep.subr.mxu0 0.0
      %248 = vmatpush1.msra.mxu0 0.0
      %249 = vmatprep.subr.mxu0 0.0
      %250 = vmatpush1.msra.mxu0 0.0
      %251 = vmatprep.subr.mxu0 0.0
      %252 = vmatpush1.msra.mxu0 0.0
      %253 = vmatprep.subr.mxu0 0.0
      %254 = vmatpush1.msra.mxu0 0.0
      %255 = vmatprep.subr.mxu0 0.0
      %256 = vmatpush1.msra.mxu0 0.0
      %257 = vmatprep.subr.mxu0 0.0
      %258 = vmatpush1.msra.mxu0 0.0
      %259 = vmatprep.subr.mxu0 0.0
      %260 = vmatpush1.msra.mxu0 0.0
      %261 = vmatprep.subr.mxu0 0.0
      %262 = vmatpush1.msra.mxu0 0.0
      %263 = vmatprep.subr.mxu0 0.0
      %264 = vmatpush1.msra.mxu0 0.0
      %265 = vmatprep.subr.mxu0 0.0
      %266 = vmatpush1.msra.mxu0 0.0
      %267 = vmatprep.subr.mxu0 0.0
      %268 = vmatpush1.msra.mxu0 0.0
      %269 = vmatprep.subr.mxu0 0.0
      %270 = vmatpush1.msra.mxu0 0.0
      %271 = vmatprep.subr.mxu0 0.0
      %272 = vmatpush1.msra.mxu0 0.0
      %273 = vmatprep.subr.mxu0 0.0
      %274 = vmatpush1.msra.mxu0 0.0
      %275 = vmatprep.subr.mxu0 0.0
      %276 = vmatpush1.msra.mxu0 0.0
      %277 = vmatprep.subr.mxu0 0.0
      %278 = vmatpush1.msra.mxu0 0.0
      %279 = vmatprep.subr.mxu0 0.0
      %280 = vmatpush1.msra.mxu0 0.0
      %281 = vmatprep.subr.mxu0 0.0
      %282 = vmatpush1.msra.mxu0 0.0
      %283 = vmatprep.subr.mxu0 0.0
      %284 = vmatpush1.msra.mxu0 0.0
      %285 = vmatprep.subr.mxu0 0.0
      %286 = vmatpush1.msra.mxu0 0.0
      %287 = vmatprep.subr.mxu0 0.0
      %288 = vmatpush1.msra.mxu0 0.0
      %289 = vmatprep.subr.mxu0 0.0
      %290 = vmatpush1.msra.mxu0 0.0
      %291 = vmatprep.subr.mxu0 0.0
      %292 = vmatpush1.msra.mxu0 0.0
      %293 = vmatprep.subr.mxu0 0.0
      %294 = vmatpush1.msra.mxu0 0.0
      %295 = vmatprep.subr.mxu0 0.0
      %296 = vmatpush1.msra.mxu0 0.0
      %297 = vmatprep.subr.mxu0 0.0
      %298 = vmatpush1.msra.mxu0 0.0
      %299 = vmatprep.subr.mxu0 0.0
      %300 = vmatpush1.msra.mxu0 0.0
      %301 = vmatprep.mubr.f32.mxu0 0.0
      %302 = vmatmul.mubr.f32.gmra.mrb[0].mxu0 %v226
      %v303 = vpop.f32.mrb[0].mxu0
      %v304 = vadd.f32 0.0, %v303
      %v305 = vpop.f32.mrb[0].mxu0
      %306 = vmatprep.mubr.f32.mxu0 0.0
      %307 = vmatmul.mubr.f32.gmra.mrb[0].mxu0 %v229
      %v308 = vpop.f32.mrb[0].mxu0
      %v309 = vadd.f32 0.0, %v308
      %v310 = vpop.f32.mrb[0].mxu0
      %311 = vmatprep.mubr.f32.mxu0 0.0
      %312 = vmatmul.mubr.f32.gmra.mrb[0].mxu0 %v232
      %v313 = vpop.f32.mrb[0].mxu0
      %v314 = vadd.f32 0.0, %v313
      %v315 = vpop.f32.mrb[0].mxu0
      %316 = vmatprep.mubr.f32.mxu0 0.0
      %317 = vmatmul.mubr.f32.gmra.mrb[0].mxu0 %v235
      %v318 = vpop.f32.mrb[0].mxu0
      %v319 = vadd.f32 0.0, %v318
      %v320 = vpop.f32.mrb[0].mxu0
      %321 = vdwg.mxu0
      %322 = vst [vmem:[#allocation3] sm:$0xff] %v304
      %323 = vst [vmem:[#allocation3 + $0x8] sm:$0xff] %v309
      %324 = vst [vmem:[#allocation3 + $0x10] sm:$0xff] %v314
      %325 = vst [vmem:[#allocation3 + $0x18] sm:$0xff] %v319
      %v326 = vld [vmem:[%s2] sm:$0xff]
      %v327 = vld [vmem:[%s2 + $0x8] sm:$0xff]
      %v328 = vld [vmem:[%s2 + $0x10] sm:$0xff]
      %v329 = vld [vmem:[%s2 + $0x18] sm:$0xff]
      %v330 = vld [vmem:[%s2 + $0x20] sm:$0xff]
      %v331 = vld [vmem:[%s2 + $0x28] sm:$0xff]
      %v332 = vld [vmem:[%s2 + $0x30] sm:$0xff]
      %v333 = vld [vmem:[%s2 + $0x38] sm:$0xff]
      %v334 = vld [vmem:[%s2 + $0x40] sm:$0xff]
      %v335 = vld [vmem:[%s2 + $0x48] sm:$0xff]
      %v336 = vld [vmem:[%s2 + $0x50] sm:$0xff]
      %v337 = vld [vmem:[%s2 + $0x58] sm:$0xff]
      %v338 = vld [vmem:[%s2 + $0x60] sm:$0xff]
      %v339 = vld [vmem:[%s2 + $0x68] sm:$0xff]
      %v340 = vld [vmem:[%s2 + $0x70] sm:$0xff]
      %v341 = vld [vmem:[%s2 + $0x78] sm:$0xff]
      %v342 = vld [vmem:[#allocation2] sm:$0xff]
      %v343 = vld [vmem:[#allocation3] sm:$0xff]
      %344 = vmatprep.subr.mxu0 0.0
      %345 = vmatpush1.msra.mxu0 %v326
      %346 = vmatprep.subr.mxu0 0.0
      %347 = vmatpush1.msra.mxu0 %v327
      %348 = vmatprep.subr.mxu0 0.0
      %349 = vmatpush1.msra.mxu0 %v328
      %350 = vmatprep.subr.mxu0 0.0
      %351 = vmatpush1.msra.mxu0 %v329
      %352 = vmatprep.subr.mxu0 0.0
      %353 = vmatpush1.msra.mxu0 %v330
      %354 = vmatprep.subr.mxu0 0.0
      %355 = vmatpush1.msra.mxu0 %v331
      %356 = vmatprep.subr.mxu0 0.0
      %357 = vmatpush1.msra.mxu0 %v332
      %358 = vmatprep.subr.mxu0 0.0
      %359 = vmatpush1.msra.mxu0 %v333
      %360 = vmatprep.subr.mxu0 0.0
      %361 = vmatpush1.msra.mxu0 %v334
      %362 = vmatprep.subr.mxu0 0.0
      %363 = vmatpush1.msra.mxu0 %v335
      %364 = vmatprep.subr.mxu0 0.0
      %365 = vmatpush1.msra.mxu0 %v336
      %366 = vmatprep.subr.mxu0 0.0
      %367 = vmatpush1.msra.mxu0 %v337
      %368 = vmatprep.subr.mxu0 0.0
      %369 = vmatpush1.msra.mxu0 %v338
      %370 = vmatprep.subr.mxu0 0.0
      %371 = vmatpush1.msra.mxu0 %v339
      %372 = vmatprep.subr.mxu0 0.0
      %373 = vmatpush1.msra.mxu0 %v340
      %374 = vmatprep.subr.mxu0 0.0
      %375 = vmatpush1.msra.mxu0 %v341
      %376 = vmatprep.subr.mxu0 0.0
      %377 = vmatpush1.msra.mxu0 0.0
      %378 = vmatprep.subr.mxu0 0.0
      %379 = vmatpush1.msra.mxu0 0.0
      %380 = vmatprep.subr.mxu0 0.0
      %381 = vmatpush1.msra.mxu0 0.0
      %382 = vmatprep.subr.mxu0 0.0
      %383 = vmatpush1.msra.mxu0 0.0
      %384 = vmatprep.subr.mxu0 0.0
      %385 = vmatpush1.msra.mxu0 0.0
      %386 = vmatprep.subr.mxu0 0.0
      %387 = vmatpush1.msra.mxu0 0.0
      %388 = vmatprep.subr.mxu0 0.0
      %389 = vmatpush1.msra.mxu0 0.0
      %390 = vmatprep.subr.mxu0 0.0
      %391 = vmatpush1.msra.mxu0 0.0
      %392 = vmatprep.subr.mxu0 0.0
      %393 = vmatpush1.msra.mxu0 0.0
      %394 = vmatprep.subr.mxu0 0.0
      %395 = vmatpush1.msra.mxu0 0.0
      %396 = vmatprep.subr.mxu0 0.0
      %397 = vmatpush1.msra.mxu0 0.0
      %398 = vmatprep.subr.mxu0 0.0
      %399 = vmatpush1.msra.mxu0 0.0
      %400 = vmatprep.subr.mxu0 0.0
      %401 = vmatpush1.msra.mxu0 0.0
      %402 = vmatprep.subr.mxu0 0.0
      %403 = vmatpush1.msra.mxu0 0.0
      %404 = vmatprep.subr.mxu0 0.0
      %405 = vmatpush1.msra.mxu0 0.0
      %406 = vmatprep.subr.mxu0 0.0
      %407 = vmatpush1.msra.mxu0 0.0
      %408 = vmatprep.mubr.f32.mxu0 0.0
      %409 = vmatmul.mubr.f32.gmra.mrb[0].mxu0 %v342
      %v410 = vpop.f32.mrb[0].mxu0
      %v411 = vadd.f32 0.0, %v410
      %v412 = vpop.f32.mrb[0].mxu0
      %413 = vdwg.mxu0
      %v414 = vadd.f32 %v343, %v411
      %v415 = vtanh.pop %v414
      %s416 = scalar_lea.vmem [#allocation3], 8
      %v417 = vld [vmem:[%s416] sm:$0xff]
      %418 = vmatprep.subr.mxu0 0.0
      %419 = vmatpush1.msra.mxu0 %v326
      %420 = vmatprep.subr.mxu0 0.0
      %421 = vmatpush1.msra.mxu0 %v327
      %422 = vmatprep.subr.mxu0 0.0
      %423 = vmatpush1.msra.mxu0 %v328
      %424 = vmatprep.subr.mxu0 0.0
      %425 = vmatpush1.msra.mxu0 %v329
      %426 = vmatprep.subr.mxu0 0.0
      %427 = vmatpush1.msra.mxu0 %v330
      %428 = vmatprep.subr.mxu0 0.0
      %429 = vmatpush1.msra.mxu0 %v331
      %430 = vmatprep.subr.mxu0 0.0
      %431 = vmatpush1.msra.mxu0 %v332
      %432 = vmatprep.subr.mxu0 0.0
      %433 = vmatpush1.msra.mxu0 %v333
      %434 = vmatprep.subr.mxu0 0.0
      %435 = vmatpush1.msra.mxu0 %v334
      %436 = vmatprep.subr.mxu0 0.0
      %437 = vmatpush1.msra.mxu0 %v335
      %438 = vmatprep.subr.mxu0 0.0
      %439 = vmatpush1.msra.mxu0 %v336
      %440 = vmatprep.subr.mxu0 0.0
      %441 = vmatpush1.msra.mxu0 %v337
      %442 = vmatprep.subr.mxu0 0.0
      %443 = vmatpush1.msra.mxu0 %v338
      %444 = vmatprep.subr.mxu0 0.0
      %445 = vmatpush1.msra.mxu0 %v339
      %446 = vmatprep.subr.mxu0 0.0
      %447 = vmatpush1.msra.mxu0 %v340
      %448 = vmatprep.subr.mxu0 0.0
      %449 = vmatpush1.msra.mxu0 %v341
      %450 = vmatprep.subr.mxu0 0.0
      %451 = vmatpush1.msra.mxu0 0.0
      %452 = vmatprep.subr.mxu0 0.0
      %453 = vmatpush1.msra.mxu0 0.0
      %454 = vmatprep.subr.mxu0 0.0
      %455 = vmatpush1.msra.mxu0 0.0
      %456 = vmatprep.subr.mxu0 0.0
      %457 = vmatpush1.msra.mxu0 0.0
      %458 = vmatprep.subr.mxu0 0.0
      %459 = vmatpush1.msra.mxu0 0.0
      %460 = vmatprep.subr.mxu0 0.0
      %461 = vmatpush1.msra.mxu0 0.0
      %462 = vmatprep.subr.mxu0 0.0
      %463 = vmatpush1.msra.mxu0 0.0
      %464 = vmatprep.subr.mxu0 0.0
      %465 = vmatpush1.msra.mxu0 0.0
      %466 = vmatprep.subr.mxu0 0.0
      %467 = vmatpush1.msra.mxu0 0.0
      %468 = vmatprep.subr.mxu0 0.0
      %469 = vmatpush1.msra.mxu0 0.0
      %470 = vmatprep.subr.mxu0 0.0
      %471 = vmatpush1.msra.mxu0 0.0
      %472 = vmatprep.subr.mxu0 0.0
      %473 = vmatpush1.msra.mxu0 0.0
      %474 = vmatprep.subr.mxu0 0.0
      %475 = vmatpush1.msra.mxu0 0.0
      %476 = vmatprep.subr.mxu0 0.0
      %477 = vmatpush1.msra.mxu0 0.0
      %478 = vmatprep.subr.mxu0 0.0
      %479 = vmatpush1.msra.mxu0 0.0
      %480 = vmatprep.subr.mxu0 0.0
      %481 = vmatpush1.msra.mxu0 0.0
      %482 = vmatprep.mubr.f32.mxu0 0.0
      %483 = vmatmul.mubr.f32.gmra.mrb[0].mxu0 %v415
      %v484 = vpop.f32.mrb[0].mxu0
      %v485 = vadd.f32 0.0, %v484
      %v486 = vpop.f32.mrb[0].mxu0
      %487 = vdwg.mxu0
      %v488 = vadd.f32 %v417, %v485
      %v489 = vtanh.pop %v488
      %s490 = scalar_lea.vmem [#allocation3], 16
      %v491 = vld [vmem:[%s490] sm:$0xff]
      %492 = vmatprep.subr.mxu0 0.0
      %493 = vmatpush1.msra.mxu0 %v326
      %494 = vmatprep.subr.mxu0 0.0
      %495 = vmatpush1.msra.mxu0 %v327
      %496 = vmatprep.subr.mxu0 0.0
      %497 = vmatpush1.msra.mxu0 %v328
      %498 = vmatprep.subr.mxu0 0.0
      %499 = vmatpush1.msra.mxu0 %v329
      %500 = vmatprep.subr.mxu0 0.0
      %501 = vmatpush1.msra.mxu0 %v330
      %502 = vmatprep.subr.mxu0 0.0
      %503 = vmatpush1.msra.mxu0 %v331
      %504 = vmatprep.subr.mxu0 0.0
      %505 = vmatpush1.msra.mxu0 %v332
      %506 = vmatprep.subr.mxu0 0.0
      %507 = vmatpush1.msra.mxu0 %v333
      %508 = vmatprep.subr.mxu0 0.0
      %509 = vmatpush1.msra.mxu0 %v334
      %510 = vmatprep.subr.mxu0 0.0
      %511 = vmatpush1.msra.mxu0 %v335
      %512 = vmatprep.subr.mxu0 0.0
      %513 = vmatpush1.msra.mxu0 %v336
      %514 = vmatprep.subr.mxu0 0.0
      %515 = vmatpush1.msra.mxu0 %v337
      %516 = vmatprep.subr.mxu0 0.0
      %517 = vmatpush1.msra.mxu0 %v338
      %518 = vmatprep.subr.mxu0 0.0
      %519 = vmatpush1.msra.mxu0 %v339
      %520 = vmatprep.subr.mxu0 0.0
      %521 = vmatpush1.msra.mxu0 %v340
      %522 = vmatprep.subr.mxu0 0.0
      %523 = vmatpush1.msra.mxu0 %v341
      %524 = vmatprep.subr.mxu0 0.0
      %525 = vmatpush1.msra.mxu0 0.0
      %526 = vmatprep.subr.mxu0 0.0
      %527 = vmatpush1.msra.mxu0 0.0
      %528 = vmatprep.subr.mxu0 0.0
      %529 = vmatpush1.msra.mxu0 0.0
      %530 = vmatprep.subr.mxu0 0.0
      %531 = vmatpush1.msra.mxu0 0.0
      %532 = vmatprep.subr.mxu0 0.0
      %533 = vmatpush1.msra.mxu0 0.0
      %534 = vmatprep.subr.mxu0 0.0
      %535 = vmatpush1.msra.mxu0 0.0
      %536 = vmatprep.subr.mxu0 0.0
      %537 = vmatpush1.msra.mxu0 0.0
      %538 = vmatprep.subr.mxu0 0.0
      %539 = vmatpush1.msra.mxu0 0.0
      %540 = vmatprep.subr.mxu0 0.0
      %541 = vmatpush1.msra.mxu0 0.0
      %542 = vmatprep.subr.mxu0 0.0
      %543 = vmatpush1.msra.mxu0 0.0
      %544 = vmatprep.subr.mxu0 0.0
      %545 = vmatpush1.msra.mxu0 0.0
      %546 = vmatprep.subr.mxu0 0.0
      %547 = vmatpush1.msra.mxu0 0.0
      %548 = vmatprep.subr.mxu0 0.0
      %549 = vmatpush1.msra.mxu0 0.0
      %550 = vmatprep.subr.mxu0 0.0
      %551 = vmatpush1.msra.mxu0 0.0
      %552 = vmatprep.subr.mxu0 0.0
      %553 = vmatpush1.msra.mxu0 0.0
      %554 = vmatprep.subr.mxu0 0.0
      %555 = vmatpush1.msra.mxu0 0.0
      %556 = vmatprep.mubr.f32.mxu0 0.0
      %557 = vmatmul.mubr.f32.gmra.mrb[0].mxu0 %v489
      %v558 = vpop.f32.mrb[0].mxu0
      %v559 = vadd.f32 0.0, %v558
      %v560 = vpop.f32.mrb[0].mxu0
      %561 = vdwg.mxu0
      %v562 = vadd.f32 %v491, %v559
      %v563 = vtanh.pop %v562
      %s564 = scalar_lea.vmem [#allocation3], 24
      %v565 = vld [vmem:[%s564] sm:$0xff]
      %566 = vmatprep.subr.mxu0 0.0
      %567 = vmatpush1.msra.mxu0 %v326
      %568 = vmatprep.subr.mxu0 0.0
      %569 = vmatpush1.msra.mxu0 %v327
      %570 = vmatprep.subr.mxu0 0.0
      %571 = vmatpush1.msra.mxu0 %v328
      %572 = vmatprep.subr.mxu0 0.0
      %573 = vmatpush1.msra.mxu0 %v329
      %574 = vmatprep.subr.mxu0 0.0
      %575 = vmatpush1.msra.mxu0 %v330
      %576 = vmatprep.subr.mxu0 0.0
      %577 = vmatpush1.msra.mxu0 %v331
      %578 = vmatprep.subr.mxu0 0.0
      %579 = vmatpush1.msra.mxu0 %v332
      %580 = vmatprep.subr.mxu0 0.0
      %581 = vmatpush1.msra.mxu0 %v333
      %582 = vmatprep.subr.mxu0 0.0
      %583 = vmatpush1.msra.mxu0 %v334
      %584 = vmatprep.subr.mxu0 0.0
      %585 = vmatpush1.msra.mxu0 %v335
      %586 = vmatprep.subr.mxu0 0.0
      %587 = vmatpush1.msra.mxu0 %v336
      %588 = vmatprep.subr.mxu0 0.0
      %589 = vmatpush1.msra.mxu0 %v337
      %590 = vmatprep.subr.mxu0 0.0
      %591 = vmatpush1.msra.mxu0 %v338
      %592 = vmatprep.subr.mxu0 0.0
      %593 = vmatpush1.msra.mxu0 %v339
      %594 = vmatprep.subr.mxu0 0.0
      %595 = vmatpush1.msra.mxu0 %v340
      %596 = vmatprep.subr.mxu0 0.0
      %597 = vmatpush1.msra.mxu0 %v341
      %598 = vmatprep.subr.mxu0 0.0
      %599 = vmatpush1.msra.mxu0 0.0
      %600 = vmatprep.subr.mxu0 0.0
      %601 = vmatpush1.msra.mxu0 0.0
      %602 = vmatprep.subr.mxu0 0.0
      %603 = vmatpush1.msra.mxu0 0.0
      %604 = vmatprep.subr.mxu0 0.0
      %605 = vmatpush1.msra.mxu0 0.0
      %606 = vmatprep.subr.mxu0 0.0
      %607 = vmatpush1.msra.mxu0 0.0
      %608 = vmatprep.subr.mxu0 0.0
      %609 = vmatpush1.msra.mxu0 0.0
      %610 = vmatprep.subr.mxu0 0.0
      %611 = vmatpush1.msra.mxu0 0.0
      %612 = vmatprep.subr.mxu0 0.0
      %613 = vmatpush1.msra.mxu0 0.0
      %614 = vmatprep.subr.mxu0 0.0
      %615 = vmatpush1.msra.mxu0 0.0
      %616 = vmatprep.subr.mxu0 0.0
      %617 = vmatpush1.msra.mxu0 0.0
      %618 = vmatprep.subr.mxu0 0.0
      %619 = vmatpush1.msra.mxu0 0.0
      %620 = vmatprep.subr.mxu0 0.0
      %621 = vmatpush1.msra.mxu0 0.0
      %622 = vmatprep.subr.mxu0 0.0
      %623 = vmatpush1.msra.mxu0 0.0
      %624 = vmatprep.subr.mxu0 0.0
      %625 = vmatpush1.msra.mxu0 0.0
      %626 = vmatprep.subr.mxu0 0.0
      %627 = vmatpush1.msra.mxu0 0.0
      %628 = vmatprep.subr.mxu0 0.0
      %629 = vmatpush1.msra.mxu0 0.0
      %630 = vmatprep.mubr.f32.mxu0 0.0
      %631 = vmatmul.mubr.f32.gmra.mrb[0].mxu0 %v563
      %v632 = vpop.f32.mrb[0].mxu0
      %v633 = vadd.f32 0.0, %v632
      %v634 = vpop.f32.mrb[0].mxu0
      %635 = vdwg.mxu0
      %v636 = vadd.f32 %v565, %v633
      %v637 = vtanh.pop %v636
      %638 = vst [vmem:[#allocation2] sm:$0xff] %v637
      %p639 = scmp.eq.s32.totalorder %s16, 1
      // Predicated region
      $region45: #{rnn_forward.1} parent=39 // pred_check
        %p640 = pneg %p639
      $region46: #{rnn_forward.1} parent=39 // pred_check_branch
        %642 = sbr.rel (%p640) target = $region48
      $region47: #{rnn_forward.1} parent=39 // pred_region
        %v643 = vld [vmem:[%s3] sm:$0xff]
        %v644 = vld [vmem:[%s3 + $0x8] sm:$0xff]
        %v645 = vld [vmem:[%s3 + $0x10] sm:$0xff]
        %v646 = vld [vmem:[%s3 + $0x18] sm:$0xff]
        %v647 = vld [vmem:[%s3 + $0x20] sm:$0xff]
        %v648 = vld [vmem:[%s3 + $0x28] sm:$0xff]
        %v649 = vld [vmem:[%s3 + $0x30] sm:$0xff]
        %v650 = vld [vmem:[%s3 + $0x38] sm:$0xff]
        %v651 = vld [vmem:[%s3 + $0x40] sm:$0xff]
        %v652 = vld [vmem:[%s3 + $0x48] sm:$0xff]
        %v653 = vld [vmem:[%s3 + $0x50] sm:$0xff]
        %v654 = vld [vmem:[%s3 + $0x58] sm:$0xff]
        %v655 = vld [vmem:[%s3 + $0x60] sm:$0xff]
        %v656 = vld [vmem:[%s3 + $0x68] sm:$0xff]
        %v657 = vld [vmem:[%s3 + $0x70] sm:$0xff]
        %v658 = vld [vmem:[%s3 + $0x78] sm:$0xff]
        %v659 = vld [vmem:[%s4] sm:$0x1]
        %v661 = vlaneseq
        %v662 = vshrl.u32 %v661, 7
        %v663 = vsub.s32 0, %v662
        %v664 = vrot.slane %v659, %v663
        %666 = vmatprep.subr.mxu0 0.0
        %667 = vmatpush1.msra.mxu0 %v643
        %668 = vmatprep.subr.mxu0 0.0
        %669 = vmatpush1.msra.mxu0 %v644
        %670 = vmatprep.subr.mxu0 0.0
        %671 = vmatpush1.msra.mxu0 %v645
        %672 = vmatprep.subr.mxu0 0.0
        %673 = vmatpush1.msra.mxu0 %v646
        %674 = vmatprep.subr.mxu0 0.0
        %675 = vmatpush1.msra.mxu0 %v647
        %676 = vmatprep.subr.mxu0 0.0
        %677 = vmatpush1.msra.mxu0 %v648
        %678 = vmatprep.subr.mxu0 0.0
        %679 = vmatpush1.msra.mxu0 %v649
        %680 = vmatprep.subr.mxu0 0.0
        %681 = vmatpush1.msra.mxu0 %v650
        %682 = vmatprep.subr.mxu0 0.0
        %683 = vmatpush1.msra.mxu0 %v651
        %684 = vmatprep.subr.mxu0 0.0
        %685 = vmatpush1.msra.mxu0 %v652
        %686 = vmatprep.subr.mxu0 0.0
        %687 = vmatpush1.msra.mxu0 %v653
        %688 = vmatprep.subr.mxu0 0.0
        %689 = vmatpush1.msra.mxu0 %v654
        %690 = vmatprep.subr.mxu0 0.0
        %691 = vmatpush1.msra.mxu0 %v655
        %692 = vmatprep.subr.mxu0 0.0
        %693 = vmatpush1.msra.mxu0 %v656
        %694 = vmatprep.subr.mxu0 0.0
        %695 = vmatpush1.msra.mxu0 %v657
        %696 = vmatprep.subr.mxu0 0.0
        %697 = vmatpush1.msra.mxu0 %v658
        %698 = vmatprep.subr.mxu0 0.0
        %699 = vmatpush1.msra.mxu0 0.0
        %700 = vmatprep.subr.mxu0 0.0
        %701 = vmatpush1.msra.mxu0 0.0
        %702 = vmatprep.subr.mxu0 0.0
        %703 = vmatpush1.msra.mxu0 0.0
        %704 = vmatprep.subr.mxu0 0.0
        %705 = vmatpush1.msra.mxu0 0.0
        %706 = vmatprep.subr.mxu0 0.0
        %707 = vmatpush1.msra.mxu0 0.0
        %708 = vmatprep.subr.mxu0 0.0
        %709 = vmatpush1.msra.mxu0 0.0
        %710 = vmatprep.subr.mxu0 0.0
        %711 = vmatpush1.msra.mxu0 0.0
        %712 = vmatprep.subr.mxu0 0.0
        %713 = vmatpush1.msra.mxu0 0.0
        %714 = vmatprep.subr.mxu0 0.0
        %715 = vmatpush1.msra.mxu0 0.0
        %716 = vmatprep.subr.mxu0 0.0
        %717 = vmatpush1.msra.mxu0 0.0
        %718 = vmatprep.subr.mxu0 0.0
        %719 = vmatpush1.msra.mxu0 0.0
        %720 = vmatprep.subr.mxu0 0.0
        %721 = vmatpush1.msra.mxu0 0.0
        %722 = vmatprep.subr.mxu0 0.0
        %723 = vmatpush1.msra.mxu0 0.0
        %724 = vmatprep.subr.mxu0 0.0
        %725 = vmatpush1.msra.mxu0 0.0
        %726 = vmatprep.subr.mxu0 0.0
        %727 = vmatpush1.msra.mxu0 0.0
        %728 = vmatprep.subr.mxu0 0.0
        %729 = vmatpush1.msra.mxu0 0.0
        %730 = vmatprep.mubr.f32.mxu0 0.0
        %731 = vmatmul.mubr.f32.gmra.mrb[0].mxu0 %v637
        %v732 = vpop.f32.mrb[0].mxu0
        %v733 = vadd.f32 %v664, %v732
        %v734 = vpop.f32.mrb[0].mxu0
        %735 = vdwg.mxu0
        %736 = vst [vmem:[%s5] sm:$0xff] %v733
      $region48: #{rnn_forward.1} parent=39 // pred_fallthru
        _
      // Predicated region
      $region49: #{rnn_forward.1} parent=39 // pred_check
        %p737 = pneg %p139
      $region50: #{rnn_forward.1} parent=39 // pred_check_branch
        %739 = sbr.rel (%p737) target = $region52
      $region51: #{rnn_forward.1} parent=39 // pred_region
        _
      $region52: #{rnn_forward.1} parent=39 // pred_fallthru
        _
      // Predicated region
      $region53: #{rnn_forward.1} parent=39 // pred_check
        %p740 = pneg %p139
      $region54: #{rnn_forward.1} parent=39 // pred_check_branch
        %742 = sbr.rel (%p740) target = $region56
      $region55: #{rnn_forward.1} parent=39 // pred_region
        _
      $region56: #{rnn_forward.1} parent=39 // pred_fallthru
        _
    $region40: #{rnn_forward.1} parent=5 // pred_fallthru
      _
    %p743 = scmp.le.s32.totalorder 2, %s11
    // Predicated region
    $region57: #{rnn_forward.1} parent=5 // pred_check
      %p744 = pneg %p743
    $region58: #{rnn_forward.1} parent=5 // pred_check_branch
      %746 = sbr.rel (%p744) target = $region60
    $region59: #{rnn_forward.1} parent=5 // pred_region
      %s747 = ssub.s32 %s11, 2
    $region60: #{rnn_forward.1} parent=5 // pred_fallthru
      _
  $region6: #{rnn_forward.1} parent=0 // loop_footer
    %s15 = sadd.s32 1, %s11
  $region7: #{rnn_forward.1} parent=0 // loop_footer_branch
    %10 = sbr.rel target = $region3
  $region8: #{rnn_forward.1} parent=0 // loop_exit
    _

</llo_original>
